<compile_context>
chip_gen: v7x
topology: tpu7x:2x2x1
jax: 0.10.0
libtpu: 0.0.40
codegen_flags: <defaults>
</compile_context>

<pallas_src>
import functools

import jax
import jax.numpy as jnp
import numpy as np
from jax import lax
from jax.experimental import pallas as pl
from jax.experimental.pallas import tpu as pltpu


def lstm_tagger_kernel(xs_ref, wih_ref, whh_ref, b_ref, wl_ref, bl_ref, out_ref,
                       *, n_paths, p_pad, seq_len):
    """Single-shot batched LSTM over all paths + max-pool + linear + sigmoid.

    xs_ref : (T*P_pad, D)   time-major embedded inputs (padded paths are zeros)
    wih_ref: (D, 4H)        W_ih^T  (PyTorch gate order i, f, g, o; g cols pre-scaled x2)
    whh_ref: (H, 4H)        W_hh^T  (g cols pre-scaled x2)
    b_ref  : (1, 4H)        b_ih + b_hh (g cols pre-scaled x2)
    wl_ref : (H, OUT_PAD)   W_lin^T zero-padded to 128 lanes
    bl_ref : (1, OUT_PAD)   b_lin zero-padded to 128 lanes
    out_ref: (1, OUT_PAD)
    """
    H = whh_ref.shape[0]
    G = whh_ref.shape[1]            # 4H

    # One big, MXU-friendly input projection for all (time, path) pairs.
    xproj = jnp.dot(xs_ref[...], wih_ref[...],
                    preferred_element_type=jnp.float32) + b_ref[...]    # (T*P_pad, 4H)

    whh = whh_ref[...]                                                   # (H, 4H)

    # Hoisted lane-constant affine turning sigmoid(2x) of the pre-scaled g-gate
    # columns into tanh(x) = 2*sigmoid(2x) - 1; identity elsewhere.
    lane = lax.broadcasted_iota(jnp.int32, (p_pad, G), 1)
    g_lane = (lane >= 2 * H) & (lane < 3 * H)
    aff_a = jnp.where(g_lane, 2.0, 1.0)
    aff_b = jnp.where(g_lane, -1.0, 0.0)

    h = jnp.zeros((p_pad, H), jnp.float32)
    c = jnp.zeros((p_pad, H), jnp.float32)

    # Statically unrolled recurrence: only h @ W_hh^T is on the serial path.
    for t in range(seq_len):
        gates = xproj[t * p_pad:(t + 1) * p_pad, :] + jnp.dot(
            h, whh, preferred_element_type=jnp.float32)                  # (P_pad, 4H)
        # Exact sigmoid in the loop (approx-recip error would compound over T steps).
        sig = 1.0 / (1.0 + jnp.exp(-gates))        # single full-128-lane EUP pass
        act = sig * aff_a + aff_b                   # i,f,o: sigmoid; g: tanh
        i_g = act[:, 0 * H:1 * H]
        f_g = act[:, 1 * H:2 * H]
        g_g = act[:, 2 * H:3 * H]
        o_g = act[:, 3 * H:4 * H]
        c = f_g * c + i_g * g_g
        h = o_g * jnp.tanh(c)

    # Max-pool over real paths (mask padded rows), then Linear + sigmoid.
    row = lax.broadcasted_iota(jnp.int32, (p_pad, H), 0)
    h_masked = jnp.where(row < n_paths, h, -jnp.inf)
    hmax = jnp.max(h_masked, axis=0, keepdims=True)                      # (1, H)
    logits = jnp.dot(hmax, wl_ref[...],
                     preferred_element_type=jnp.float32) + bl_ref[...]   # (1, OUT_PAD)
    # Final output sigmoid: approx reciprocal is fine here (single store, not in loop).
    out_ref[...] = pl.reciprocal(1.0 + jnp.exp(-logits), approx=True)


def prepare_params(embed, w_ih, w_hh, b_ih, b_hh, w_lin, b_lin):
    """Precompute (once per model) transposed / pre-scaled / lane-padded weights."""
    H = w_hh.shape[1]
    out_dim = w_lin.shape[0]
    out_pad = max(128, ((out_dim + 127) // 128) * 128)   # lane-dense output block

    wih_t = jnp.asarray(w_ih.T, jnp.float32)                              # (D, 4H)
    whh_t = jnp.asarray(w_hh.T, jnp.float32)                              # (H, 4H)
    b = jnp.asarray((b_ih + b_hh).reshape(1, 4 * H), jnp.float32)         # (1, 4H)

    # Fold the 2x of tanh(x) = 2*sigmoid(2x) - 1 into the g-gate columns (2H:3H).
    col = jnp.arange(4 * H)
    scale = jnp.where((col >= 2 * H) & (col < 3 * H), 2.0, 1.0).astype(jnp.float32)
    wih_t = wih_t * scale[None, :]
    whh_t = whh_t * scale[None, :]
    b = b * scale[None, :]

    wl_t = jnp.zeros((H, out_pad), jnp.float32).at[:, :out_dim].set(
        jnp.asarray(w_lin.T, jnp.float32))
    bl = jnp.zeros((1, out_pad), jnp.float32).at[:, :out_dim].set(
        jnp.asarray(b_lin, jnp.float32))

    return dict(embed=jnp.asarray(embed, jnp.float32),
                wih_t=wih_t, whh_t=whh_t, b=b, wl_t=wl_t, bl=bl)


@functools.partial(jax.jit, static_argnames=("out_dim",))
def lstm_tagger_forward(paths, params, *, out_dim):
    """Fused forward: gather + prep + Pallas kernel, all under one jit."""
    P, T = paths.shape
    D = params["embed"].shape[1]
    out_pad = params["wl_t"].shape[1]
    P_pad = max(8, ((P + 7) // 8) * 8)       # sublane-aligned path batch

    # Embedding gather stays outside the kernel (keeps the table out of VMEM) but
    # is fused into the same XLA program by jit.  Time-major, padded rows are zero.
    # TODO(synk): optionally move the gather in-kernel via
    #             PrefetchScalarGridSpec(num_scalar_prefetch=1) with `paths` in SMEM
    #             and the table in VMEM (gate on table size + vmem_limit_bytes for v7x).
    x = jnp.take(params["embed"], paths, axis=0)                          # (P, T, D)
    x = jnp.transpose(x, (1, 0, 2))                                       # (T, P, D)
    x = jnp.pad(x, ((0, 0), (0, P_pad - P), (0, 0)))                      # (T, P_pad, D)
    xs = x.reshape(T * P_pad, D)

    kernel = functools.partial(lstm_tagger_kernel,
                               n_paths=P, p_pad=P_pad, seq_len=T)

    vmem = pl.BlockSpec(memory_space=pltpu.MemorySpace.VMEM)
    out = pl.pallas_call(
        kernel,
        out_shape=jax.ShapeDtypeStruct((1, out_pad), jnp.float32),
        in_specs=[vmem] * 6,
        out_specs=vmem,
    )(xs, params["wih_t"], params["whh_t"], params["b"],
      params["wl_t"], params["bl"])
    return out[:, :out_dim].reshape(1, 1, out_dim)


def reference_forward(paths, embed, w_ih, w_hh, b_ih, b_hh, w_lin, b_lin):
    """Pure-JAX reference of the intended PyTorch forward."""
    P, T = paths.shape
    H = w_hh.shape[1]
    hs = []
    for p in range(P):
        h = jnp.zeros((1, H), jnp.float32)
        c = jnp.zeros((1, H), jnp.float32)
        for t in range(T):
            x = embed[paths[p, t]][None, :]
            gates = x @ w_ih.T + h @ w_hh.T + b_ih + b_hh
            i = jax.nn.sigmoid(gates[:, :H])
            f = jax.nn.sigmoid(gates[:, H:2 * H])
            g = jnp.tanh(gates[:, 2 * H:3 * H])
            o = jax.nn.sigmoid(gates[:, 3 * H:])
            c = f * c + i * g
            h = o * jnp.tanh(c)
        hs.append(h)
    sum_hidden = jnp.concatenate(hs, axis=0)          # (P, H)
    max_pool = jnp.max(sum_hidden, axis=0, keepdims=True)
    out = jax.nn.sigmoid(max_pool @ w_lin.T + b_lin)
    return out.reshape(1, 1, -1)


if __name__ == "__main__":
    # Small, deterministic shapes consistent with the module.
    node_size, input_dim, hidden_dim, out_dim = 32, 16, 32, 8
    num_paths, path_len = 4, 8

    key = jax.random.PRNGKey(0)
    ks = jax.random.split(key, 8)
    s = 1.0 / np.sqrt(hidden_dim)

    pre_embedding = jax.random.normal(ks[0], (node_size, input_dim), jnp.float32)
    w_ih = jax.random.uniform(ks[1], (4 * hidden_dim, input_dim), jnp.float32, -s, s)
    w_hh = jax.random.uniform(ks[2], (4 * hidden_dim, hidden_dim), jnp.float32, -s, s)
    b_ih = jax.random.uniform(ks[3], (4 * hidden_dim,), jnp.float32, -s, s)
    b_hh = jax.random.uniform(ks[4], (4 * hidden_dim,), jnp.float32, -s, s)
    w_lin = jax.random.uniform(ks[5], (out_dim, hidden_dim), jnp.float32, -s, s)
    b_lin = jax.random.uniform(ks[6], (out_dim,), jnp.float32, -s, s)
    paths = jax.random.randint(ks[7], (num_paths, path_len), 0, node_size, jnp.int32)

    params = prepare_params(pre_embedding, w_ih, w_hh, b_ih, b_hh, w_lin, b_lin)

    out = lstm_tagger_forward(paths, params, out_dim=out_dim)
    out = jax.block_until_ready(out)

    ref = reference_forward(paths, pre_embedding, w_ih, w_hh, b_ih, b_hh,
                            w_lin, b_lin)
    assert out.shape == (1, 1, out_dim), out.shape
    np.testing.assert_allclose(np.asarray(out), np.asarray(ref),
                               rtol=5e-3, atol=5e-3)
    print("KERNEL_OK")
</pallas_src>

<mosaic_0001>
module attributes {stable_mosaic.version = 11 : i64} {
  func.func @lstm_tagger_kernel(%arg0: memref<64x16xf32, #tpu.memory_space<vmem>>, %arg1: memref<16x128xf32, #tpu.memory_space<vmem>>, %arg2: memref<32x128xf32, #tpu.memory_space<vmem>>, %arg3: memref<1x128xf32, #tpu.memory_space<vmem>>, %arg4: memref<32x128xf32, #tpu.memory_space<vmem>>, %arg5: memref<1x128xf32, #tpu.memory_space<vmem>>, %arg6: memref<1x128xf32, #tpu.memory_space<vmem>>) attributes {dimension_semantics = [], scalar_prefetch = 0 : i64, scratch_operands = 0 : i64, tpu.core_type = #tpu.core_type<tc>} {
    %c0 = arith.constant 0 : index
    %c0_0 = arith.constant 0 : index
    %0 = vector.load %arg0[%c0, %c0_0] : memref<64x16xf32, #tpu.memory_space<vmem>>, vector<64x16xf32>
    %c0_1 = arith.constant 0 : index
    %c0_2 = arith.constant 0 : index
    %1 = vector.load %arg1[%c0_1, %c0_2] : memref<16x128xf32, #tpu.memory_space<vmem>>, vector<16x128xf32>
    %cst = arith.constant dense<0.000000e+00> : vector<64x128xf32>
    %2 = tpu.matmul %0, %1, %cst {dimension_numbers = #tpu.dot_dimension_numbers<[1], [0], [0], [1], [0, 0, 1, 1], [], []>} : vector<64x16xf32>, vector<16x128xf32>, vector<64x128xf32> -> vector<64x128xf32>
    %c0_3 = arith.constant 0 : index
    %c0_4 = arith.constant 0 : index
    %3 = vector.load %arg3[%c0_3, %c0_4] : memref<1x128xf32, #tpu.memory_space<vmem>>, vector<1x128xf32>
    %4 = vector.broadcast %3 : vector<1x128xf32> to vector<64x128xf32>
    %5 = arith.addf %2, %4 : vector<64x128xf32>
    %c0_5 = arith.constant 0 : index
    %c0_6 = arith.constant 0 : index
    %6 = vector.load %arg2[%c0_5, %c0_6] : memref<32x128xf32, #tpu.memory_space<vmem>>, vector<32x128xf32>
    %7 = tpu.iota {dimensions = array<i32: 1>} : vector<8x128xi32>
    %c64_i32 = arith.constant 64 : i32
    %8 = vector.broadcast %c64_i32 : i32 to vector<8x128xi32>
    %9 = arith.cmpi sge, %7, %8 : vector<8x128xi32>
    %c96_i32 = arith.constant 96 : i32
    %10 = vector.broadcast %c96_i32 : i32 to vector<8x128xi32>
    %11 = arith.cmpi slt, %7, %10 : vector<8x128xi32>
    %12 = arith.andi %9, %11 : vector<8x128xi1>
    %cst_7 = arith.constant 2.000000e+00 : f32
    %cst_8 = arith.constant 1.000000e+00 : f32
    %13 = vector.broadcast %cst_7 : f32 to vector<8x128xf32>
    %14 = vector.broadcast %cst_8 : f32 to vector<8x128xf32>
    %15 = arith.select %12, %13, %14 : vector<8x128xi1>, vector<8x128xf32>
    %cst_9 = arith.constant -1.000000e+00 : f32
    %cst_10 = arith.constant 0.000000e+00 : f32
    %16 = vector.broadcast %cst_9 : f32 to vector<8x128xf32>
    %17 = vector.broadcast %cst_10 : f32 to vector<8x128xf32>
    %18 = arith.select %12, %16, %17 : vector<8x128xi1>, vector<8x128xf32>
    %cst_11 = arith.constant 0.000000e+00 : f32
    %19 = vector.broadcast %cst_11 : f32 to vector<8x32xf32>
    %cst_12 = arith.constant 0.000000e+00 : f32
    %20 = vector.broadcast %cst_12 : f32 to vector<8x32xf32>
    %21 = vector.extract_strided_slice %5 {offsets = [0, 0], sizes = [8, 128], strides = [1, 1]} : vector<64x128xf32> to vector<8x128xf32>
    %cst_13 = arith.constant dense<0.000000e+00> : vector<8x128xf32>
    %22 = tpu.matmul %19, %6, %cst_13 {dimension_numbers = #tpu.dot_dimension_numbers<[1], [0], [0], [1], [0, 0, 1, 1], [], []>} : vector<8x32xf32>, vector<32x128xf32>, vector<8x128xf32> -> vector<8x128xf32>
    %23 = arith.addf %21, %22 : vector<8x128xf32>
    %cst_14 = arith.constant 0.000000e+00 : f32
    %24 = vector.broadcast %cst_14 : f32 to vector<8x128xf32>
    %25 = arith.subf %24, %23 : vector<8x128xf32>
    %26 = math.exp %25 : vector<8x128xf32>
    %cst_15 = arith.constant 1.000000e+00 : f32
    %27 = vector.broadcast %cst_15 : f32 to vector<8x128xf32>
    %28 = arith.addf %27, %26 : vector<8x128xf32>
    %cst_16 = arith.constant 1.000000e+00 : f32
    %29 = vector.broadcast %cst_16 : f32 to vector<8x128xf32>
    %30 = arith.divf %29, %28 : vector<8x128xf32>
    %31 = arith.mulf %30, %15 : vector<8x128xf32>
    %32 = arith.addf %31, %18 : vector<8x128xf32>
    %33 = vector.extract_strided_slice %32 {offsets = [0, 0], sizes = [8, 32], strides = [1, 1]} : vector<8x128xf32> to vector<8x32xf32>
    %34 = vector.extract_strided_slice %32 {offsets = [0, 32], sizes = [8, 32], strides = [1, 1]} : vector<8x128xf32> to vector<8x32xf32>
    %35 = vector.extract_strided_slice %32 {offsets = [0, 64], sizes = [8, 32], strides = [1, 1]} : vector<8x128xf32> to vector<8x32xf32>
    %36 = vector.extract_strided_slice %32 {offsets = [0, 96], sizes = [8, 32], strides = [1, 1]} : vector<8x128xf32> to vector<8x32xf32>
    %37 = arith.mulf %34, %20 : vector<8x32xf32>
    %38 = arith.mulf %33, %35 : vector<8x32xf32>
    %39 = arith.addf %37, %38 : vector<8x32xf32>
    %40 = math.tanh %39 : vector<8x32xf32>
    %41 = arith.mulf %36, %40 : vector<8x32xf32>
    %42 = vector.extract_strided_slice %5 {offsets = [8, 0], sizes = [8, 128], strides = [1, 1]} : vector<64x128xf32> to vector<8x128xf32>
    %cst_17 = arith.constant dense<0.000000e+00> : vector<8x128xf32>
    %43 = tpu.matmul %41, %6, %cst_17 {dimension_numbers = #tpu.dot_dimension_numbers<[1], [0], [0], [1], [0, 0, 1, 1], [], []>} : vector<8x32xf32>, vector<32x128xf32>, vector<8x128xf32> -> vector<8x128xf32>
    %44 = arith.addf %42, %43 : vector<8x128xf32>
    %cst_18 = arith.constant 0.000000e+00 : f32
    %45 = vector.broadcast %cst_18 : f32 to vector<8x128xf32>
    %46 = arith.subf %45, %44 : vector<8x128xf32>
    %47 = math.exp %46 : vector<8x128xf32>
    %cst_19 = arith.constant 1.000000e+00 : f32
    %48 = vector.broadcast %cst_19 : f32 to vector<8x128xf32>
    %49 = arith.addf %48, %47 : vector<8x128xf32>
    %cst_20 = arith.constant 1.000000e+00 : f32
    %50 = vector.broadcast %cst_20 : f32 to vector<8x128xf32>
    %51 = arith.divf %50, %49 : vector<8x128xf32>
    %52 = arith.mulf %51, %15 : vector<8x128xf32>
    %53 = arith.addf %52, %18 : vector<8x128xf32>
    %54 = vector.extract_strided_slice %53 {offsets = [0, 0], sizes = [8, 32], strides = [1, 1]} : vector<8x128xf32> to vector<8x32xf32>
    %55 = vector.extract_strided_slice %53 {offsets = [0, 32], sizes = [8, 32], strides = [1, 1]} : vector<8x128xf32> to vector<8x32xf32>
    %56 = vector.extract_strided_slice %53 {offsets = [0, 64], sizes = [8, 32], strides = [1, 1]} : vector<8x128xf32> to vector<8x32xf32>
    %57 = vector.extract_strided_slice %53 {offsets = [0, 96], sizes = [8, 32], strides = [1, 1]} : vector<8x128xf32> to vector<8x32xf32>
    %58 = arith.mulf %55, %39 : vector<8x32xf32>
    %59 = arith.mulf %54, %56 : vector<8x32xf32>
    %60 = arith.addf %58, %59 : vector<8x32xf32>
    %61 = math.tanh %60 : vector<8x32xf32>
    %62 = arith.mulf %57, %61 : vector<8x32xf32>
    %63 = vector.extract_strided_slice %5 {offsets = [16, 0], sizes = [8, 128], strides = [1, 1]} : vector<64x128xf32> to vector<8x128xf32>
    %cst_21 = arith.constant dense<0.000000e+00> : vector<8x128xf32>
    %64 = tpu.matmul %62, %6, %cst_21 {dimension_numbers = #tpu.dot_dimension_numbers<[1], [0], [0], [1], [0, 0, 1, 1], [], []>} : vector<8x32xf32>, vector<32x128xf32>, vector<8x128xf32> -> vector<8x128xf32>
    %65 = arith.addf %63, %64 : vector<8x128xf32>
    %cst_22 = arith.constant 0.000000e+00 : f32
    %66 = vector.broadcast %cst_22 : f32 to vector<8x128xf32>
    %67 = arith.subf %66, %65 : vector<8x128xf32>
    %68 = math.exp %67 : vector<8x128xf32>
    %cst_23 = arith.constant 1.000000e+00 : f32
    %69 = vector.broadcast %cst_23 : f32 to vector<8x128xf32>
    %70 = arith.addf %69, %68 : vector<8x128xf32>
    %cst_24 = arith.constant 1.000000e+00 : f32
    %71 = vector.broadcast %cst_24 : f32 to vector<8x128xf32>
    %72 = arith.divf %71, %70 : vector<8x128xf32>
    %73 = arith.mulf %72, %15 : vector<8x128xf32>
    %74 = arith.addf %73, %18 : vector<8x128xf32>
    %75 = vector.extract_strided_slice %74 {offsets = [0, 0], sizes = [8, 32], strides = [1, 1]} : vector<8x128xf32> to vector<8x32xf32>
    %76 = vector.extract_strided_slice %74 {offsets = [0, 32], sizes = [8, 32], strides = [1, 1]} : vector<8x128xf32> to vector<8x32xf32>
    %77 = vector.extract_strided_slice %74 {offsets = [0, 64], sizes = [8, 32], strides = [1, 1]} : vector<8x128xf32> to vector<8x32xf32>
    %78 = vector.extract_strided_slice %74 {offsets = [0, 96], sizes = [8, 32], strides = [1, 1]} : vector<8x128xf32> to vector<8x32xf32>
    %79 = arith.mulf %76, %60 : vector<8x32xf32>
    %80 = arith.mulf %75, %77 : vector<8x32xf32>
    %81 = arith.addf %79, %80 : vector<8x32xf32>
    %82 = math.tanh %81 : vector<8x32xf32>
    %83 = arith.mulf %78, %82 : vector<8x32xf32>
    %84 = vector.extract_strided_slice %5 {offsets = [24, 0], sizes = [8, 128], strides = [1, 1]} : vector<64x128xf32> to vector<8x128xf32>
    %cst_25 = arith.constant dense<0.000000e+00> : vector<8x128xf32>
    %85 = tpu.matmul %83, %6, %cst_25 {dimension_numbers = #tpu.dot_dimension_numbers<[1], [0], [0], [1], [0, 0, 1, 1], [], []>} : vector<8x32xf32>, vector<32x128xf32>, vector<8x128xf32> -> vector<8x128xf32>
    %86 = arith.addf %84, %85 : vector<8x128xf32>
    %cst_26 = arith.constant 0.000000e+00 : f32
    %87 = vector.broadcast %cst_26 : f32 to vector<8x128xf32>
    %88 = arith.subf %87, %86 : vector<8x128xf32>
    %89 = math.exp %88 : vector<8x128xf32>
    %cst_27 = arith.constant 1.000000e+00 : f32
    %90 = vector.broadcast %cst_27 : f32 to vector<8x128xf32>
    %91 = arith.addf %90, %89 : vector<8x128xf32>
    %cst_28 = arith.constant 1.000000e+00 : f32
    %92 = vector.broadcast %cst_28 : f32 to vector<8x128xf32>
    %93 = arith.divf %92, %91 : vector<8x128xf32>
    %94 = arith.mulf %93, %15 : vector<8x128xf32>
    %95 = arith.addf %94, %18 : vector<8x128xf32>
    %96 = vector.extract_strided_slice %95 {offsets = [0, 0], sizes = [8, 32], strides = [1, 1]} : vector<8x128xf32> to vector<8x32xf32>
    %97 = vector.extract_strided_slice %95 {offsets = [0, 32], sizes = [8, 32], strides = [1, 1]} : vector<8x128xf32> to vector<8x32xf32>
    %98 = vector.extract_strided_slice %95 {offsets = [0, 64], sizes = [8, 32], strides = [1, 1]} : vector<8x128xf32> to vector<8x32xf32>
    %99 = vector.extract_strided_slice %95 {offsets = [0, 96], sizes = [8, 32], strides = [1, 1]} : vector<8x128xf32> to vector<8x32xf32>
    %100 = arith.mulf %97, %81 : vector<8x32xf32>
    %101 = arith.mulf %96, %98 : vector<8x32xf32>
    %102 = arith.addf %100, %101 : vector<8x32xf32>
    %103 = math.tanh %102 : vector<8x32xf32>
    %104 = arith.mulf %99, %103 : vector<8x32xf32>
    %105 = vector.extract_strided_slice %5 {offsets = [32, 0], sizes = [8, 128], strides = [1, 1]} : vector<64x128xf32> to vector<8x128xf32>
    %cst_29 = arith.constant dense<0.000000e+00> : vector<8x128xf32>
    %106 = tpu.matmul %104, %6, %cst_29 {dimension_numbers = #tpu.dot_dimension_numbers<[1], [0], [0], [1], [0, 0, 1, 1], [], []>} : vector<8x32xf32>, vector<32x128xf32>, vector<8x128xf32> -> vector<8x128xf32>
    %107 = arith.addf %105, %106 : vector<8x128xf32>
    %cst_30 = arith.constant 0.000000e+00 : f32
    %108 = vector.broadcast %cst_30 : f32 to vector<8x128xf32>
    %109 = arith.subf %108, %107 : vector<8x128xf32>
    %110 = math.exp %109 : vector<8x128xf32>
    %cst_31 = arith.constant 1.000000e+00 : f32
    %111 = vector.broadcast %cst_31 : f32 to vector<8x128xf32>
    %112 = arith.addf %111, %110 : vector<8x128xf32>
    %cst_32 = arith.constant 1.000000e+00 : f32
    %113 = vector.broadcast %cst_32 : f32 to vector<8x128xf32>
    %114 = arith.divf %113, %112 : vector<8x128xf32>
    %115 = arith.mulf %114, %15 : vector<8x128xf32>
    %116 = arith.addf %115, %18 : vector<8x128xf32>
    %117 = vector.extract_strided_slice %116 {offsets = [0, 0], sizes = [8, 32], strides = [1, 1]} : vector<8x128xf32> to vector<8x32xf32>
    %118 = vector.extract_strided_slice %116 {offsets = [0, 32], sizes = [8, 32], strides = [1, 1]} : vector<8x128xf32> to vector<8x32xf32>
    %119 = vector.extract_strided_slice %116 {offsets = [0, 64], sizes = [8, 32], strides = [1, 1]} : vector<8x128xf32> to vector<8x32xf32>
    %120 = vector.extract_strided_slice %116 {offsets = [0, 96], sizes = [8, 32], strides = [1, 1]} : vector<8x128xf32> to vector<8x32xf32>
    %121 = arith.mulf %118, %102 : vector<8x32xf32>
    %122 = arith.mulf %117, %119 : vector<8x32xf32>
    %123 = arith.addf %121, %122 : vector<8x32xf32>
    %124 = math.tanh %123 : vector<8x32xf32>
    %125 = arith.mulf %120, %124 : vector<8x32xf32>
    %126 = vector.extract_strided_slice %5 {offsets = [40, 0], sizes = [8, 128], strides = [1, 1]} : vector<64x128xf32> to vector<8x128xf32>
    %cst_33 = arith.constant dense<0.000000e+00> : vector<8x128xf32>
    %127 = tpu.matmul %125, %6, %cst_33 {dimension_numbers = #tpu.dot_dimension_numbers<[1], [0], [0], [1], [0, 0, 1, 1], [], []>} : vector<8x32xf32>, vector<32x128xf32>, vector<8x128xf32> -> vector<8x128xf32>
    %128 = arith.addf %126, %127 : vector<8x128xf32>
    %cst_34 = arith.constant 0.000000e+00 : f32
    %129 = vector.broadcast %cst_34 : f32 to vector<8x128xf32>
    %130 = arith.subf %129, %128 : vector<8x128xf32>
    %131 = math.exp %130 : vector<8x128xf32>
    %cst_35 = arith.constant 1.000000e+00 : f32
    %132 = vector.broadcast %cst_35 : f32 to vector<8x128xf32>
    %133 = arith.addf %132, %131 : vector<8x128xf32>
    %cst_36 = arith.constant 1.000000e+00 : f32
    %134 = vector.broadcast %cst_36 : f32 to vector<8x128xf32>
    %135 = arith.divf %134, %133 : vector<8x128xf32>
    %136 = arith.mulf %135, %15 : vector<8x128xf32>
    %137 = arith.addf %136, %18 : vector<8x128xf32>
    %138 = vector.extract_strided_slice %137 {offsets = [0, 0], sizes = [8, 32], strides = [1, 1]} : vector<8x128xf32> to vector<8x32xf32>
    %139 = vector.extract_strided_slice %137 {offsets = [0, 32], sizes = [8, 32], strides = [1, 1]} : vector<8x128xf32> to vector<8x32xf32>
    %140 = vector.extract_strided_slice %137 {offsets = [0, 64], sizes = [8, 32], strides = [1, 1]} : vector<8x128xf32> to vector<8x32xf32>
    %141 = vector.extract_strided_slice %137 {offsets = [0, 96], sizes = [8, 32], strides = [1, 1]} : vector<8x128xf32> to vector<8x32xf32>
    %142 = arith.mulf %139, %123 : vector<8x32xf32>
    %143 = arith.mulf %138, %140 : vector<8x32xf32>
    %144 = arith.addf %142, %143 : vector<8x32xf32>
    %145 = math.tanh %144 : vector<8x32xf32>
    %146 = arith.mulf %141, %145 : vector<8x32xf32>
    %147 = vector.extract_strided_slice %5 {offsets = [48, 0], sizes = [8, 128], strides = [1, 1]} : vector<64x128xf32> to vector<8x128xf32>
    %cst_37 = arith.constant dense<0.000000e+00> : vector<8x128xf32>
    %148 = tpu.matmul %146, %6, %cst_37 {dimension_numbers = #tpu.dot_dimension_numbers<[1], [0], [0], [1], [0, 0, 1, 1], [], []>} : vector<8x32xf32>, vector<32x128xf32>, vector<8x128xf32> -> vector<8x128xf32>
    %149 = arith.addf %147, %148 : vector<8x128xf32>
    %cst_38 = arith.constant 0.000000e+00 : f32
    %150 = vector.broadcast %cst_38 : f32 to vector<8x128xf32>
    %151 = arith.subf %150, %149 : vector<8x128xf32>
    %152 = math.exp %151 : vector<8x128xf32>
    %cst_39 = arith.constant 1.000000e+00 : f32
    %153 = vector.broadcast %cst_39 : f32 to vector<8x128xf32>
    %154 = arith.addf %153, %152 : vector<8x128xf32>
    %cst_40 = arith.constant 1.000000e+00 : f32
    %155 = vector.broadcast %cst_40 : f32 to vector<8x128xf32>
    %156 = arith.divf %155, %154 : vector<8x128xf32>
    %157 = arith.mulf %156, %15 : vector<8x128xf32>
    %158 = arith.addf %157, %18 : vector<8x128xf32>
    %159 = vector.extract_strided_slice %158 {offsets = [0, 0], sizes = [8, 32], strides = [1, 1]} : vector<8x128xf32> to vector<8x32xf32>
    %160 = vector.extract_strided_slice %158 {offsets = [0, 32], sizes = [8, 32], strides = [1, 1]} : vector<8x128xf32> to vector<8x32xf32>
    %161 = vector.extract_strided_slice %158 {offsets = [0, 64], sizes = [8, 32], strides = [1, 1]} : vector<8x128xf32> to vector<8x32xf32>
    %162 = vector.extract_strided_slice %158 {offsets = [0, 96], sizes = [8, 32], strides = [1, 1]} : vector<8x128xf32> to vector<8x32xf32>
    %163 = arith.mulf %160, %144 : vector<8x32xf32>
    %164 = arith.mulf %159, %161 : vector<8x32xf32>
    %165 = arith.addf %163, %164 : vector<8x32xf32>
    %166 = math.tanh %165 : vector<8x32xf32>
    %167 = arith.mulf %162, %166 : vector<8x32xf32>
    %168 = vector.extract_strided_slice %5 {offsets = [56, 0], sizes = [8, 128], strides = [1, 1]} : vector<64x128xf32> to vector<8x128xf32>
    %cst_41 = arith.constant dense<0.000000e+00> : vector<8x128xf32>
    %169 = tpu.matmul %167, %6, %cst_41 {dimension_numbers = #tpu.dot_dimension_numbers<[1], [0], [0], [1], [0, 0, 1, 1], [], []>} : vector<8x32xf32>, vector<32x128xf32>, vector<8x128xf32> -> vector<8x128xf32>
    %170 = arith.addf %168, %169 : vector<8x128xf32>
    %cst_42 = arith.constant 0.000000e+00 : f32
    %171 = vector.broadcast %cst_42 : f32 to vector<8x128xf32>
    %172 = arith.subf %171, %170 : vector<8x128xf32>
    %173 = math.exp %172 : vector<8x128xf32>
    %cst_43 = arith.constant 1.000000e+00 : f32
    %174 = vector.broadcast %cst_43 : f32 to vector<8x128xf32>
    %175 = arith.addf %174, %173 : vector<8x128xf32>
    %cst_44 = arith.constant 1.000000e+00 : f32
    %176 = vector.broadcast %cst_44 : f32 to vector<8x128xf32>
    %177 = arith.divf %176, %175 : vector<8x128xf32>
    %178 = arith.mulf %177, %15 : vector<8x128xf32>
    %179 = arith.addf %178, %18 : vector<8x128xf32>
    %180 = vector.extract_strided_slice %179 {offsets = [0, 0], sizes = [8, 32], strides = [1, 1]} : vector<8x128xf32> to vector<8x32xf32>
    %181 = vector.extract_strided_slice %179 {offsets = [0, 32], sizes = [8, 32], strides = [1, 1]} : vector<8x128xf32> to vector<8x32xf32>
    %182 = vector.extract_strided_slice %179 {offsets = [0, 64], sizes = [8, 32], strides = [1, 1]} : vector<8x128xf32> to vector<8x32xf32>
    %183 = vector.extract_strided_slice %179 {offsets = [0, 96], sizes = [8, 32], strides = [1, 1]} : vector<8x128xf32> to vector<8x32xf32>
    %184 = arith.mulf %181, %165 : vector<8x32xf32>
    %185 = arith.mulf %180, %182 : vector<8x32xf32>
    %186 = arith.addf %184, %185 : vector<8x32xf32>
    %187 = math.tanh %186 : vector<8x32xf32>
    %188 = arith.mulf %183, %187 : vector<8x32xf32>
    %189 = tpu.iota {dimensions = array<i32: 0>} : vector<8x32xi32>
    %c4_i32 = arith.constant 4 : i32
    %190 = vector.broadcast %c4_i32 : i32 to vector<8x32xi32>
    %191 = arith.cmpi slt, %189, %190 : vector<8x32xi32>
    %cst_45 = arith.constant 0xFF800000 : f32
    %192 = vector.broadcast %cst_45 : f32 to vector<8x32xf32>
    %193 = arith.select %191, %188, %192 : vector<8x32xi1>, vector<8x32xf32>
    %cst_46 = arith.constant dense<0xFF800000> : vector<32xf32>
    %194 = vector.multi_reduction <maximumf>, %193, %cst_46 [0] : vector<8x32xf32> to vector<32xf32>
    %195 = vector.shape_cast %194 : vector<32xf32> to vector<1x32xf32>
    %c0_47 = arith.constant 0 : index
    %c0_48 = arith.constant 0 : index
    %196 = vector.load %arg4[%c0_47, %c0_48] : memref<32x128xf32, #tpu.memory_space<vmem>>, vector<32x128xf32>
    %cst_49 = arith.constant dense<0.000000e+00> : vector<1x128xf32>
    %197 = tpu.matmul %195, %196, %cst_49 {dimension_numbers = #tpu.dot_dimension_numbers<[1], [0], [0], [1], [0, 0, 1, 1], [], []>} : vector<1x32xf32>, vector<32x128xf32>, vector<1x128xf32> -> vector<1x128xf32>
    %c0_50 = arith.constant 0 : index
    %c0_51 = arith.constant 0 : index
    %198 = vector.load %arg5[%c0_50, %c0_51] : memref<1x128xf32, #tpu.memory_space<vmem>>, vector<1x128xf32>
    %199 = arith.addf %197, %198 : vector<1x128xf32>
    %cst_52 = arith.constant 0.000000e+00 : f32
    %200 = vector.broadcast %cst_52 : f32 to vector<1x128xf32>
    %201 = arith.subf %200, %199 : vector<1x128xf32>
    %202 = math.exp %201 : vector<1x128xf32>
    %cst_53 = arith.constant 1.000000e+00 : f32
    %203 = vector.broadcast %cst_53 : f32 to vector<1x128xf32>
    %204 = arith.addf %203, %202 : vector<1x128xf32>
    %205 = tpu.reciprocal %204 {approx = true} : vector<1x128xf32> -> vector<1x128xf32>
    %c0_54 = arith.constant 0 : index
    %c0_55 = arith.constant 0 : index
    %206 = vector.load %arg6[%c0_54, %c0_55] : memref<1x128xf32, #tpu.memory_space<vmem>>, vector<1x128xf32>
    tpu.vector_store %arg6[%c0_54, %c0_55], %205 {strides = array<i32>} : memref<1x128xf32, #tpu.memory_space<vmem>>, vector<1x128xf32>,
    return
  }
}

</mosaic_0001>

<llo_original>
// kernel: lstm_tagger_forward.1
$region0: #{lstm_tagger_forward.1}
  #allocation0 [shape = 'u32[]', space=smem, size = 0x4, offset = 0x4, fixed_abs, tag = 'smem constant byte address 0x4 - core index']
  #allocation1 [shape = 'u32[144,128]{1,0:T(1,128)}', space=vmem, size = 0x12000, scoped, tag = 'internal scratch']
  %s0 = inlined_call_operand.vmem [shape: f32[64,16], index: 0, kind: input, shape index: {}]
  %s1 = inlined_call_operand.vmem [shape: f32[16,128], index: 1, kind: input, shape index: {}]
  %s2 = inlined_call_operand.vmem [shape: f32[32,128], index: 2, kind: input, shape index: {}]
  %s3 = inlined_call_operand.vmem [shape: f32[1,128], index: 3, kind: input, shape index: {}]
  %s4 = inlined_call_operand.vmem [shape: f32[32,128], index: 4, kind: input, shape index: {}]
  %s5 = inlined_call_operand.vmem [shape: f32[1,128], index: 5, kind: input, shape index: {}]
  %s6 = inlined_call_operand.vmem [shape: f32[1,128], index: 6, kind: output, shape index: {}]
  %s7 = sld [smem:[#allocation0]]
  $region34: #{lstm_tagger_forward.1} parent=0
    _
  %s9 = ssub.s32 1, %s7
  %s10 = scalar_select 0, %s9, %s7
  // Predicated region
  $region2: #{lstm_tagger_forward.1} parent=0 // pred_check
    _
  $region3: #{lstm_tagger_forward.1} parent=0 // pred_check_branch
    %12 = sbr.rel (0) target = $region5
  $region4: #{lstm_tagger_forward.1} parent=0 // pred_region
    _
  $region5: #{lstm_tagger_forward.1} parent=0 // pred_fallthru
    _
  // Predicated region
  $region6: #{lstm_tagger_forward.1} parent=0 // pred_check
    _
  $region7: #{lstm_tagger_forward.1} parent=0 // pred_check_branch
    %14 = sbr.rel (0) target = $region9
  $region8: #{lstm_tagger_forward.1} parent=0 // pred_region
    _
  $region9: #{lstm_tagger_forward.1} parent=0 // pred_fallthru
    _
  // Predicated region
  $region10: #{lstm_tagger_forward.1} parent=0 // pred_check
    _
  $region11: #{lstm_tagger_forward.1} parent=0 // pred_check_branch
    %16 = sbr.rel (0) target = $region13
  $region12: #{lstm_tagger_forward.1} parent=0 // pred_region
    _
  $region13: #{lstm_tagger_forward.1} parent=0 // pred_fallthru
    _
  // Predicated region
  $region14: #{lstm_tagger_forward.1} parent=0 // pred_check
    _
  $region15: #{lstm_tagger_forward.1} parent=0 // pred_check_branch
    %18 = sbr.rel (0) target = $region17
  $region16: #{lstm_tagger_forward.1} parent=0 // pred_region
    _
  $region17: #{lstm_tagger_forward.1} parent=0 // pred_fallthru
    _
  // Predicated region
  $region18: #{lstm_tagger_forward.1} parent=0 // pred_check
    _
  $region19: #{lstm_tagger_forward.1} parent=0 // pred_check_branch
    %20 = sbr.rel (0) target = $region21
  $region20: #{lstm_tagger_forward.1} parent=0 // pred_region
    _
  $region21: #{lstm_tagger_forward.1} parent=0 // pred_fallthru
    _
  // Predicated region
  $region22: #{lstm_tagger_forward.1} parent=0 // pred_check
    _
  $region23: #{lstm_tagger_forward.1} parent=0 // pred_check_branch
    %22 = sbr.rel (0) target = $region25
  $region24: #{lstm_tagger_forward.1} parent=0 // pred_region
    _
  $region25: #{lstm_tagger_forward.1} parent=0 // pred_fallthru
    _
  %v23 = vld [vmem:[%s0] sm:$0xff]
  %v24 = vld [vmem:[%s0 + $0x8] sm:$0xff]
  %v25 = vld [vmem:[%s0 + $0x10] sm:$0xff]
  %v26 = vld [vmem:[%s0 + $0x18] sm:$0xff]
  %v27 = vld [vmem:[%s0 + $0x20] sm:$0xff]
  %v28 = vld [vmem:[%s0 + $0x28] sm:$0xff]
  %v29 = vld [vmem:[%s0 + $0x30] sm:$0xff]
  %v30 = vld [vmem:[%s0 + $0x38] sm:$0xff]
  %v31 = vld [vmem:[%s1] sm:$0xff]
  %v32 = vld [vmem:[%s1 + $0x8] sm:$0xff]
  %v33 = vld [vmem:[%s3] sm:$0x1]
  %v35 = vlaneseq
  %v36 = vshrl.u32 %v35, 7
  %v37 = vsub.s32 0, %v36
  %v38 = vrot.slane %v33, %v37
  %vm40 = vcmask 130048
  %v42 = vsel %vm40, %v23, 0
  %v45 = vsel %vm40, %v24, 0
  %v48 = vsel %vm40, %v25, 0
  %v51 = vsel %vm40, %v26, 0
  %v54 = vsel %vm40, %v27, 0
  %v57 = vsel %vm40, %v28, 0
  %v60 = vsel %vm40, %v29, 0
  %v63 = vsel %vm40, %v30, 0
  %65 = vmatprep.subr.mxu0 0.0
  %66 = vmatpush1.msra.mxu0 %v31
  %67 = vmatprep.subr.mxu0 0.0
  %68 = vmatpush1.msra.mxu0 %v32
  %69 = vmatprep.subr.mxu0 0.0
  %70 = vmatpush1.msra.mxu0 0.0
  %71 = vmatprep.subr.mxu0 0.0
  %72 = vmatpush1.msra.mxu0 0.0
  %73 = vmatprep.subr.mxu0 0.0
  %74 = vmatpush1.msra.mxu0 0.0
  %75 = vmatprep.subr.mxu0 0.0
  %76 = vmatpush1.msra.mxu0 0.0
  %77 = vmatprep.subr.mxu0 0.0
  %78 = vmatpush1.msra.mxu0 0.0
  %79 = vmatprep.subr.mxu0 0.0
  %80 = vmatpush1.msra.mxu0 0.0
  %81 = vmatprep.subr.mxu0 0.0
  %82 = vmatpush1.msra.mxu0 0.0
  %83 = vmatprep.subr.mxu0 0.0
  %84 = vmatpush1.msra.mxu0 0.0
  %85 = vmatprep.subr.mxu0 0.0
  %86 = vmatpush1.msra.mxu0 0.0
  %87 = vmatprep.subr.mxu0 0.0
  %88 = vmatpush1.msra.mxu0 0.0
  %89 = vmatprep.subr.mxu0 0.0
  %90 = vmatpush1.msra.mxu0 0.0
  %91 = vmatprep.subr.mxu0 0.0
  %92 = vmatpush1.msra.mxu0 0.0
  %93 = vmatprep.subr.mxu0 0.0
  %94 = vmatpush1.msra.mxu0 0.0
  %95 = vmatprep.subr.mxu0 0.0
  %96 = vmatpush1.msra.mxu0 0.0
  %97 = vmatprep.subr.mxu0 0.0
  %98 = vmatpush1.msra.mxu0 0.0
  %99 = vmatprep.subr.mxu0 0.0
  %100 = vmatpush1.msra.mxu0 0.0
  %101 = vmatprep.subr.mxu0 0.0
  %102 = vmatpush1.msra.mxu0 0.0
  %103 = vmatprep.subr.mxu0 0.0
  %104 = vmatpush1.msra.mxu0 0.0
  %105 = vmatprep.subr.mxu0 0.0
  %106 = vmatpush1.msra.mxu0 0.0
  %107 = vmatprep.subr.mxu0 0.0
  %108 = vmatpush1.msra.mxu0 0.0
  %109 = vmatprep.subr.mxu0 0.0
  %110 = vmatpush1.msra.mxu0 0.0
  %111 = vmatprep.subr.mxu0 0.0
  %112 = vmatpush1.msra.mxu0 0.0
  %113 = vmatprep.subr.mxu0 0.0
  %114 = vmatpush1.msra.mxu0 0.0
  %115 = vmatprep.subr.mxu0 0.0
  %116 = vmatpush1.msra.mxu0 0.0
  %117 = vmatprep.subr.mxu0 0.0
  %118 = vmatpush1.msra.mxu0 0.0
  %119 = vmatprep.subr.mxu0 0.0
  %120 = vmatpush1.msra.mxu0 0.0
  %121 = vmatprep.subr.mxu0 0.0
  %122 = vmatpush1.msra.mxu0 0.0
  %123 = vmatprep.subr.mxu0 0.0
  %124 = vmatpush1.msra.mxu0 0.0
  %125 = vmatprep.subr.mxu0 0.0
  %126 = vmatpush1.msra.mxu0 0.0
  %127 = vmatprep.subr.mxu0 0.0
  %128 = vmatpush1.msra.mxu0 0.0
  %129 = vmatprep.mubr.f32.mxu0 0.0
  %130 = vmatmul.mubr.f32.gmra.mrb[0].mxu0 %v42
  %v131 = vpop.f32.mrb[0].mxu0
  %v132 = vadd.f32 %v38, %v131
  %v133 = vpop.f32.mrb[0].mxu0
  %134 = vmatprep.mubr.f32.mxu0 0.0
  %135 = vmatmul.mubr.f32.gmra.mrb[0].mxu0 %v45
  %v136 = vpop.f32.mrb[0].mxu0
  %v137 = vadd.f32 %v38, %v136
  %v138 = vpop.f32.mrb[0].mxu0
  %139 = vmatprep.mubr.f32.mxu0 0.0
  %140 = vmatmul.mubr.f32.gmra.mrb[0].mxu0 %v48
  %v141 = vpop.f32.mrb[0].mxu0
  %v142 = vadd.f32 %v38, %v141
  %v143 = vpop.f32.mrb[0].mxu0
  %144 = vmatprep.mubr.f32.mxu0 0.0
  %145 = vmatmul.mubr.f32.gmra.mrb[0].mxu0 %v51
  %v146 = vpop.f32.mrb[0].mxu0
  %v147 = vadd.f32 %v38, %v146
  %v148 = vpop.f32.mrb[0].mxu0
  %149 = vmatprep.mubr.f32.mxu0 0.0
  %150 = vmatmul.mubr.f32.gmra.mrb[0].mxu0 %v54
  %v151 = vpop.f32.mrb[0].mxu0
  %v152 = vadd.f32 %v38, %v151
  %v153 = vpop.f32.mrb[0].mxu0
  %154 = vmatprep.mubr.f32.mxu0 0.0
  %155 = vmatmul.mubr.f32.gmra.mrb[0].mxu0 %v57
  %v156 = vpop.f32.mrb[0].mxu0
  %v157 = vadd.f32 %v38, %v156
  %v158 = vpop.f32.mrb[0].mxu0
  %159 = vmatprep.mubr.f32.mxu0 0.0
  %160 = vmatmul.mubr.f32.gmra.mrb[0].mxu0 %v60
  %v161 = vpop.f32.mrb[0].mxu0
  %v162 = vadd.f32 %v38, %v161
  %v163 = vpop.f32.mrb[0].mxu0
  %164 = vmatprep.mubr.f32.mxu0 0.0
  %165 = vmatmul.mubr.f32.gmra.mrb[0].mxu0 %v63
  %v166 = vpop.f32.mrb[0].mxu0
  %v167 = vadd.f32 %v38, %v166
  %v168 = vpop.f32.mrb[0].mxu0
  %169 = vdwg.mxu0
  %v170 = vld [vmem:[%s2] sm:$0xff]
  %v171 = vld [vmem:[%s2 + $0x8] sm:$0xff]
  %v172 = vld [vmem:[%s2 + $0x10] sm:$0xff]
  %v173 = vld [vmem:[%s2 + $0x18] sm:$0xff]
  %v174 = vlaneseq
  %v175 = vand.u32 %v174, 127
  %vm176 = vcmp.ge.s32.totalorder %v175, 64
  %vm177 = vcmp.lt.s32.totalorder %v175, 96
  %vm178 = vmand %vm176, %vm177
  %v179 = vsel %vm178, 2.0, 1.0
  %v180 = vsel %vm178, -1.0, 0.0
  %vm181 = vcmask 261120
  %v183 = vsel %vm181, 0.0, 0
  %185 = vmatprep.subr.mxu0 0.0
  %186 = vmatpush1.msra.mxu0 %v170
  %187 = vmatprep.subr.mxu0 0.0
  %188 = vmatpush1.msra.mxu0 %v171
  %189 = vmatprep.subr.mxu0 0.0
  %190 = vmatpush1.msra.mxu0 %v172
  %191 = vmatprep.subr.mxu0 0.0
  %192 = vmatpush1.msra.mxu0 %v173
  %193 = vmatprep.subr.mxu0 0.0
  %194 = vmatpush1.msra.mxu0 0.0
  %195 = vmatprep.subr.mxu0 0.0
  %196 = vmatpush1.msra.mxu0 0.0
  %197 = vmatprep.subr.mxu0 0.0
  %198 = vmatpush1.msra.mxu0 0.0
  %199 = vmatprep.subr.mxu0 0.0
  %200 = vmatpush1.msra.mxu0 0.0
  %201 = vmatprep.subr.mxu0 0.0
  %202 = vmatpush1.msra.mxu0 0.0
  %203 = vmatprep.subr.mxu0 0.0
  %204 = vmatpush1.msra.mxu0 0.0
  %205 = vmatprep.subr.mxu0 0.0
  %206 = vmatpush1.msra.mxu0 0.0
  %207 = vmatprep.subr.mxu0 0.0
  %208 = vmatpush1.msra.mxu0 0.0
  %209 = vmatprep.subr.mxu0 0.0
  %210 = vmatpush1.msra.mxu0 0.0
  %211 = vmatprep.subr.mxu0 0.0
  %212 = vmatpush1.msra.mxu0 0.0
  %213 = vmatprep.subr.mxu0 0.0
  %214 = vmatpush1.msra.mxu0 0.0
  %215 = vmatprep.subr.mxu0 0.0
  %216 = vmatpush1.msra.mxu0 0.0
  %217 = vmatprep.subr.mxu0 0.0
  %218 = vmatpush1.msra.mxu0 0.0
  %219 = vmatprep.subr.mxu0 0.0
  %220 = vmatpush1.msra.mxu0 0.0
  %221 = vmatprep.subr.mxu0 0.0
  %222 = vmatpush1.msra.mxu0 0.0
  %223 = vmatprep.subr.mxu0 0.0
  %224 = vmatpush1.msra.mxu0 0.0
  %225 = vmatprep.subr.mxu0 0.0
  %226 = vmatpush1.msra.mxu0 0.0
  %227 = vmatprep.subr.mxu0 0.0
  %228 = vmatpush1.msra.mxu0 0.0
  %229 = vmatprep.subr.mxu0 0.0
  %230 = vmatpush1.msra.mxu0 0.0
  %231 = vmatprep.subr.mxu0 0.0
  %232 = vmatpush1.msra.mxu0 0.0
  %233 = vmatprep.subr.mxu0 0.0
  %234 = vmatpush1.msra.mxu0 0.0
  %235 = vmatprep.subr.mxu0 0.0
  %236 = vmatpush1.msra.mxu0 0.0
  %237 = vmatprep.subr.mxu0 0.0
  %238 = vmatpush1.msra.mxu0 0.0
  %239 = vmatprep.subr.mxu0 0.0
  %240 = vmatpush1.msra.mxu0 0.0
  %241 = vmatprep.subr.mxu0 0.0
  %242 = vmatpush1.msra.mxu0 0.0
  %243 = vmatprep.subr.mxu0 0.0
  %244 = vmatpush1.msra.mxu0 0.0
  %245 = vmatprep.subr.mxu0 0.0
  %246 = vmatpush1.msra.mxu0 0.0
  %247 = vmatprep.subr.mxu0 0.0
  %248 = vmatpush1.msra.mxu0 0.0
  %249 = vmatprep.mubr.f32.mxu0 0.0
  %250 = vmatmul.mubr.f32.gmra.mrb[0].mxu0 %v183
  %v251 = vpop.f32.mrb[0].mxu0
  %v252 = vadd.f32 0.0, %v251
  %v253 = vpop.f32.mrb[0].mxu0
  %254 = vdwg.mxu0
  %v255 = vadd.f32 %v132, %v252
  %v256 = vsub.f32 0.0, %v255
  %v257 = vmul.f32 %v256, 1.442695
  %v258 = vpow.pop %v257
  %v259 = vadd.f32 %v258, 1.0
  %v260 = vrcp.pop %v259
  %v261 = vmul.f32 1.0, %v260
  %v262 = vmul.f32 %v261, %v179
  %v263 = vadd.f32 %v262, %v180
  %v264 = vmul.f32 %v263, 0.0
  %266 = vrot.lane.b32.xlu0 %v263, 64
  %v267 = vpop.permute.xlu0 %266
  %v269 = vmul.f32 %v263, %v267
  %271 = vrot.lane.b32.xlu0 %v269, 32
  %v272 = vpop.permute.xlu0 %271
  %v274 = vadd.f32 %v264, %v272
  %v275 = vtanh.pop %v274
  %277 = vrot.lane.b32.xlu0 %v275, 64
  %v278 = vpop.permute.xlu0 %277
  %v280 = vmul.f32 %v263, %v278
  %282 = vrot.lane.b32.xlu0 %v280, 32
  %v283 = vpop.permute.xlu0 %282
  %v284 = vsel %vm181, %v283, 0
  %286 = vmatprep.subr.mxu0 0.0
  %287 = vmatpush1.msra.mxu0 %v170
  %288 = vmatprep.subr.mxu0 0.0
  %289 = vmatpush1.msra.mxu0 %v171
  %290 = vmatprep.subr.mxu0 0.0
  %291 = vmatpush1.msra.mxu0 %v172
  %292 = vmatprep.subr.mxu0 0.0
  %293 = vmatpush1.msra.mxu0 %v173
  %294 = vmatprep.subr.mxu0 0.0
  %295 = vmatpush1.msra.mxu0 0.0
  %296 = vmatprep.subr.mxu0 0.0
  %297 = vmatpush1.msra.mxu0 0.0
  %298 = vmatprep.subr.mxu0 0.0
  %299 = vmatpush1.msra.mxu0 0.0
  %300 = vmatprep.subr.mxu0 0.0
  %301 = vmatpush1.msra.mxu0 0.0
  %302 = vmatprep.subr.mxu0 0.0
  %303 = vmatpush1.msra.mxu0 0.0
  %304 = vmatprep.subr.mxu0 0.0
  %305 = vmatpush1.msra.mxu0 0.0
  %306 = vmatprep.subr.mxu0 0.0
  %307 = vmatpush1.msra.mxu0 0.0
  %308 = vmatprep.subr.mxu0 0.0
  %309 = vmatpush1.msra.mxu0 0.0
  %310 = vmatprep.subr.mxu0 0.0
  %311 = vmatpush1.msra.mxu0 0.0
  %312 = vmatprep.subr.mxu0 0.0
  %313 = vmatpush1.msra.mxu0 0.0
  %314 = vmatprep.subr.mxu0 0.0
  %315 = vmatpush1.msra.mxu0 0.0
  %316 = vmatprep.subr.mxu0 0.0
  %317 = vmatpush1.msra.mxu0 0.0
  %318 = vmatprep.subr.mxu0 0.0
  %319 = vmatpush1.msra.mxu0 0.0
  %320 = vmatprep.subr.mxu0 0.0
  %321 = vmatpush1.msra.mxu0 0.0
  %322 = vmatprep.subr.mxu0 0.0
  %323 = vmatpush1.msra.mxu0 0.0
  %324 = vmatprep.subr.mxu0 0.0
  %325 = vmatpush1.msra.mxu0 0.0
  %326 = vmatprep.subr.mxu0 0.0
  %327 = vmatpush1.msra.mxu0 0.0
  %328 = vmatprep.subr.mxu0 0.0
  %329 = vmatpush1.msra.mxu0 0.0
  %330 = vmatprep.subr.mxu0 0.0
  %331 = vmatpush1.msra.mxu0 0.0
  %332 = vmatprep.subr.mxu0 0.0
  %333 = vmatpush1.msra.mxu0 0.0
  %334 = vmatprep.subr.mxu0 0.0
  %335 = vmatpush1.msra.mxu0 0.0
  %336 = vmatprep.subr.mxu0 0.0
  %337 = vmatpush1.msra.mxu0 0.0
  %338 = vmatprep.subr.mxu0 0.0
  %339 = vmatpush1.msra.mxu0 0.0
  %340 = vmatprep.subr.mxu0 0.0
  %341 = vmatpush1.msra.mxu0 0.0
  %342 = vmatprep.subr.mxu0 0.0
  %343 = vmatpush1.msra.mxu0 0.0
  %344 = vmatprep.subr.mxu0 0.0
  %345 = vmatpush1.msra.mxu0 0.0
  %346 = vmatprep.subr.mxu0 0.0
  %347 = vmatpush1.msra.mxu0 0.0
  %348 = vmatprep.subr.mxu0 0.0
  %349 = vmatpush1.msra.mxu0 0.0
  %350 = vmatprep.mubr.f32.mxu0 0.0
  %351 = vmatmul.mubr.f32.gmra.mrb[0].mxu0 %v284
  %v352 = vpop.f32.mrb[0].mxu0
  %v353 = vadd.f32 0.0, %v352
  %v354 = vpop.f32.mrb[0].mxu0
  %355 = vdwg.mxu0
  %v356 = vadd.f32 %v137, %v353
  %v357 = vsub.f32 0.0, %v356
  %v358 = vmul.f32 %v357, 1.442695
  %v359 = vpow.pop %v358
  %v360 = vadd.f32 %v359, 1.0
  %v361 = vrcp.pop %v360
  %v362 = vmul.f32 1.0, %v361
  %v363 = vmul.f32 %v362, %v179
  %v364 = vadd.f32 %v363, %v180
  %v365 = vmul.f32 %v364, %v274
  %367 = vrot.lane.b32.xlu0 %v364, 64
  %v368 = vpop.permute.xlu0 %367
  %v370 = vmul.f32 %v364, %v368
  %372 = vrot.lane.b32.xlu0 %v370, 32
  %v373 = vpop.permute.xlu0 %372
  %v375 = vadd.f32 %v365, %v373
  %v376 = vtanh.pop %v375
  %378 = vrot.lane.b32.xlu0 %v376, 64
  %v379 = vpop.permute.xlu0 %378
  %v381 = vmul.f32 %v364, %v379
  %383 = vrot.lane.b32.xlu0 %v381, 32
  %v384 = vpop.permute.xlu0 %383
  %v385 = vsel %vm181, %v384, 0
  %387 = vmatprep.subr.mxu0 0.0
  %388 = vmatpush1.msra.mxu0 %v170
  %389 = vmatprep.subr.mxu0 0.0
  %390 = vmatpush1.msra.mxu0 %v171
  %391 = vmatprep.subr.mxu0 0.0
  %392 = vmatpush1.msra.mxu0 %v172
  %393 = vmatprep.subr.mxu0 0.0
  %394 = vmatpush1.msra.mxu0 %v173
  %395 = vmatprep.subr.mxu0 0.0
  %396 = vmatpush1.msra.mxu0 0.0
  %397 = vmatprep.subr.mxu0 0.0
  %398 = vmatpush1.msra.mxu0 0.0
  %399 = vmatprep.subr.mxu0 0.0
  %400 = vmatpush1.msra.mxu0 0.0
  %401 = vmatprep.subr.mxu0 0.0
  %402 = vmatpush1.msra.mxu0 0.0
  %403 = vmatprep.subr.mxu0 0.0
  %404 = vmatpush1.msra.mxu0 0.0
  %405 = vmatprep.subr.mxu0 0.0
  %406 = vmatpush1.msra.mxu0 0.0
  %407 = vmatprep.subr.mxu0 0.0
  %408 = vmatpush1.msra.mxu0 0.0
  %409 = vmatprep.subr.mxu0 0.0
  %410 = vmatpush1.msra.mxu0 0.0
  %411 = vmatprep.subr.mxu0 0.0
  %412 = vmatpush1.msra.mxu0 0.0
  %413 = vmatprep.subr.mxu0 0.0
  %414 = vmatpush1.msra.mxu0 0.0
  %415 = vmatprep.subr.mxu0 0.0
  %416 = vmatpush1.msra.mxu0 0.0
  %417 = vmatprep.subr.mxu0 0.0
  %418 = vmatpush1.msra.mxu0 0.0
  %419 = vmatprep.subr.mxu0 0.0
  %420 = vmatpush1.msra.mxu0 0.0
  %421 = vmatprep.subr.mxu0 0.0
  %422 = vmatpush1.msra.mxu0 0.0
  %423 = vmatprep.subr.mxu0 0.0
  %424 = vmatpush1.msra.mxu0 0.0
  %425 = vmatprep.subr.mxu0 0.0
  %426 = vmatpush1.msra.mxu0 0.0
  %427 = vmatprep.subr.mxu0 0.0
  %428 = vmatpush1.msra.mxu0 0.0
  %429 = vmatprep.subr.mxu0 0.0
  %430 = vmatpush1.msra.mxu0 0.0
  %431 = vmatprep.subr.mxu0 0.0
  %432 = vmatpush1.msra.mxu0 0.0
  %433 = vmatprep.subr.mxu0 0.0
  %434 = vmatpush1.msra.mxu0 0.0
  %435 = vmatprep.subr.mxu0 0.0
  %436 = vmatpush1.msra.mxu0 0.0
  %437 = vmatprep.subr.mxu0 0.0
  %438 = vmatpush1.msra.mxu0 0.0
  %439 = vmatprep.subr.mxu0 0.0
  %440 = vmatpush1.msra.mxu0 0.0
  %441 = vmatprep.subr.mxu0 0.0
  %442 = vmatpush1.msra.mxu0 0.0
  %443 = vmatprep.subr.mxu0 0.0
  %444 = vmatpush1.msra.mxu0 0.0
  %445 = vmatprep.subr.mxu0 0.0
  %446 = vmatpush1.msra.mxu0 0.0
  %447 = vmatprep.subr.mxu0 0.0
  %448 = vmatpush1.msra.mxu0 0.0
  %449 = vmatprep.subr.mxu0 0.0
  %450 = vmatpush1.msra.mxu0 0.0
  %451 = vmatprep.mubr.f32.mxu0 0.0
  %452 = vmatmul.mubr.f32.gmra.mrb[0].mxu0 %v385
  %v453 = vpop.f32.mrb[0].mxu0
  %v454 = vadd.f32 0.0, %v453
  %v455 = vpop.f32.mrb[0].mxu0
  %456 = vdwg.mxu0
  %v457 = vadd.f32 %v142, %v454
  %v458 = vsub.f32 0.0, %v457
  %v459 = vmul.f32 %v458, 1.442695
  %v460 = vpow.pop %v459
  %v461 = vadd.f32 %v460, 1.0
  %v462 = vrcp.pop %v461
  %v463 = vmul.f32 1.0, %v462
  %v464 = vmul.f32 %v463, %v179
  %v465 = vadd.f32 %v464, %v180
  %v466 = vmul.f32 %v465, %v375
  %468 = vrot.lane.b32.xlu0 %v465, 64
  %v469 = vpop.permute.xlu0 %468
  %v471 = vmul.f32 %v465, %v469
  %473 = vrot.lane.b32.xlu0 %v471, 32
  %v474 = vpop.permute.xlu0 %473
  %v476 = vadd.f32 %v466, %v474
  %v477 = vtanh.pop %v476
  %479 = vrot.lane.b32.xlu0 %v477, 64
  %v480 = vpop.permute.xlu0 %479
  %v482 = vmul.f32 %v465, %v480
  %484 = vrot.lane.b32.xlu0 %v482, 32
  %v485 = vpop.permute.xlu0 %484
  %v486 = vsel %vm181, %v485, 0
  %488 = vmatprep.subr.mxu0 0.0
  %489 = vmatpush1.msra.mxu0 %v170
  %490 = vmatprep.subr.mxu0 0.0
  %491 = vmatpush1.msra.mxu0 %v171
  %492 = vmatprep.subr.mxu0 0.0
  %493 = vmatpush1.msra.mxu0 %v172
  %494 = vmatprep.subr.mxu0 0.0
  %495 = vmatpush1.msra.mxu0 %v173
  %496 = vmatprep.subr.mxu0 0.0
  %497 = vmatpush1.msra.mxu0 0.0
  %498 = vmatprep.subr.mxu0 0.0
  %499 = vmatpush1.msra.mxu0 0.0
  %500 = vmatprep.subr.mxu0 0.0
  %501 = vmatpush1.msra.mxu0 0.0
  %502 = vmatprep.subr.mxu0 0.0
  %503 = vmatpush1.msra.mxu0 0.0
  %504 = vmatprep.subr.mxu0 0.0
  %505 = vmatpush1.msra.mxu0 0.0
  %506 = vmatprep.subr.mxu0 0.0
  %507 = vmatpush1.msra.mxu0 0.0
  %508 = vmatprep.subr.mxu0 0.0
  %509 = vmatpush1.msra.mxu0 0.0
  %510 = vmatprep.subr.mxu0 0.0
  %511 = vmatpush1.msra.mxu0 0.0
  %512 = vmatprep.subr.mxu0 0.0
  %513 = vmatpush1.msra.mxu0 0.0
  %514 = vmatprep.subr.mxu0 0.0
  %515 = vmatpush1.msra.mxu0 0.0
  %516 = vmatprep.subr.mxu0 0.0
  %517 = vmatpush1.msra.mxu0 0.0
  %518 = vmatprep.subr.mxu0 0.0
  %519 = vmatpush1.msra.mxu0 0.0
  %520 = vmatprep.subr.mxu0 0.0
  %521 = vmatpush1.msra.mxu0 0.0
  %522 = vmatprep.subr.mxu0 0.0
  %523 = vmatpush1.msra.mxu0 0.0
  %524 = vmatprep.subr.mxu0 0.0
  %525 = vmatpush1.msra.mxu0 0.0
  %526 = vmatprep.subr.mxu0 0.0
  %527 = vmatpush1.msra.mxu0 0.0
  %528 = vmatprep.subr.mxu0 0.0
  %529 = vmatpush1.msra.mxu0 0.0
  %530 = vmatprep.subr.mxu0 0.0
  %531 = vmatpush1.msra.mxu0 0.0
  %532 = vmatprep.subr.mxu0 0.0
  %533 = vmatpush1.msra.mxu0 0.0
  %534 = vmatprep.subr.mxu0 0.0
  %535 = vmatpush1.msra.mxu0 0.0
  %536 = vmatprep.subr.mxu0 0.0
  %537 = vmatpush1.msra.mxu0 0.0
  %538 = vmatprep.subr.mxu0 0.0
  %539 = vmatpush1.msra.mxu0 0.0
  %540 = vmatprep.subr.mxu0 0.0
  %541 = vmatpush1.msra.mxu0 0.0
  %542 = vmatprep.subr.mxu0 0.0
  %543 = vmatpush1.msra.mxu0 0.0
  %544 = vmatprep.subr.mxu0 0.0
  %545 = vmatpush1.msra.mxu0 0.0
  %546 = vmatprep.subr.mxu0 0.0
  %547 = vmatpush1.msra.mxu0 0.0
  %548 = vmatprep.subr.mxu0 0.0
  %549 = vmatpush1.msra.mxu0 0.0
  %550 = vmatprep.subr.mxu0 0.0
  %551 = vmatpush1.msra.mxu0 0.0
  %552 = vmatprep.mubr.f32.mxu0 0.0
  %553 = vmatmul.mubr.f32.gmra.mrb[0].mxu0 %v486
  %v554 = vpop.f32.mrb[0].mxu0
  %v555 = vadd.f32 0.0, %v554
  %v556 = vpop.f32.mrb[0].mxu0
  %557 = vdwg.mxu0
  %v558 = vadd.f32 %v147, %v555
  %v559 = vsub.f32 0.0, %v558
  %v560 = vmul.f32 %v559, 1.442695
  %v561 = vpow.pop %v560
  %v562 = vadd.f32 %v561, 1.0
  %v563 = vrcp.pop %v562
  %v564 = vmul.f32 1.0, %v563
  %v565 = vmul.f32 %v564, %v179
  %v566 = vadd.f32 %v565, %v180
  %v567 = vmul.f32 %v566, %v476
  %569 = vrot.lane.b32.xlu0 %v566, 64
  %v570 = vpop.permute.xlu0 %569
  %v572 = vmul.f32 %v566, %v570
  %574 = vrot.lane.b32.xlu0 %v572, 32
  %v575 = vpop.permute.xlu0 %574
  %v577 = vadd.f32 %v567, %v575
  %v578 = vtanh.pop %v577
  %580 = vrot.lane.b32.xlu0 %v578, 64
  %v581 = vpop.permute.xlu0 %580
  %v583 = vmul.f32 %v566, %v581
  %585 = vrot.lane.b32.xlu0 %v583, 32
  %v586 = vpop.permute.xlu0 %585
  %v587 = vsel %vm181, %v586, 0
  %589 = vmatprep.subr.mxu0 0.0
  %590 = vmatpush1.msra.mxu0 %v170
  %591 = vmatprep.subr.mxu0 0.0
  %592 = vmatpush1.msra.mxu0 %v171
  %593 = vmatprep.subr.mxu0 0.0
  %594 = vmatpush1.msra.mxu0 %v172
  %595 = vmatprep.subr.mxu0 0.0
  %596 = vmatpush1.msra.mxu0 %v173
  %597 = vmatprep.subr.mxu0 0.0
  %598 = vmatpush1.msra.mxu0 0.0
  %599 = vmatprep.subr.mxu0 0.0
  %600 = vmatpush1.msra.mxu0 0.0
  %601 = vmatprep.subr.mxu0 0.0
  %602 = vmatpush1.msra.mxu0 0.0
  %603 = vmatprep.subr.mxu0 0.0
  %604 = vmatpush1.msra.mxu0 0.0
  %605 = vmatprep.subr.mxu0 0.0
  %606 = vmatpush1.msra.mxu0 0.0
  %607 = vmatprep.subr.mxu0 0.0
  %608 = vmatpush1.msra.mxu0 0.0
  %609 = vmatprep.subr.mxu0 0.0
  %610 = vmatpush1.msra.mxu0 0.0
  %611 = vmatprep.subr.mxu0 0.0
  %612 = vmatpush1.msra.mxu0 0.0
  %613 = vmatprep.subr.mxu0 0.0
  %614 = vmatpush1.msra.mxu0 0.0
  %615 = vmatprep.subr.mxu0 0.0
  %616 = vmatpush1.msra.mxu0 0.0
  %617 = vmatprep.subr.mxu0 0.0
  %618 = vmatpush1.msra.mxu0 0.0
  %619 = vmatprep.subr.mxu0 0.0
  %620 = vmatpush1.msra.mxu0 0.0
  %621 = vmatprep.subr.mxu0 0.0
  %622 = vmatpush1.msra.mxu0 0.0
  %623 = vmatprep.subr.mxu0 0.0
  %624 = vmatpush1.msra.mxu0 0.0
  %625 = vmatprep.subr.mxu0 0.0
  %626 = vmatpush1.msra.mxu0 0.0
  %627 = vmatprep.subr.mxu0 0.0
  %628 = vmatpush1.msra.mxu0 0.0
  %629 = vmatprep.subr.mxu0 0.0
  %630 = vmatpush1.msra.mxu0 0.0
  %631 = vmatprep.subr.mxu0 0.0
  %632 = vmatpush1.msra.mxu0 0.0
  %633 = vmatprep.subr.mxu0 0.0
  %634 = vmatpush1.msra.mxu0 0.0
  %635 = vmatprep.subr.mxu0 0.0
  %636 = vmatpush1.msra.mxu0 0.0
  %637 = vmatprep.subr.mxu0 0.0
  %638 = vmatpush1.msra.mxu0 0.0
  %639 = vmatprep.subr.mxu0 0.0
  %640 = vmatpush1.msra.mxu0 0.0
  %641 = vmatprep.subr.mxu0 0.0
  %642 = vmatpush1.msra.mxu0 0.0
  %643 = vmatprep.subr.mxu0 0.0
  %644 = vmatpush1.msra.mxu0 0.0
  %645 = vmatprep.subr.mxu0 0.0
  %646 = vmatpush1.msra.mxu0 0.0
  %647 = vmatprep.subr.mxu0 0.0
  %648 = vmatpush1.msra.mxu0 0.0
  %649 = vmatprep.subr.mxu0 0.0
  %650 = vmatpush1.msra.mxu0 0.0
  %651 = vmatprep.subr.mxu0 0.0
  %652 = vmatpush1.msra.mxu0 0.0
  %653 = vmatprep.mubr.f32.mxu0 0.0
  %654 = vmatmul.mubr.f32.gmra.mrb[0].mxu0 %v587
  %v655 = vpop.f32.mrb[0].mxu0
  %v656 = vadd.f32 0.0, %v655
  %v657 = vpop.f32.mrb[0].mxu0
  %658 = vdwg.mxu0
  %v659 = vadd.f32 %v152, %v656
  %v660 = vsub.f32 0.0, %v659
  %v661 = vmul.f32 %v660, 1.442695
  %v662 = vpow.pop %v661
  %v663 = vadd.f32 %v662, 1.0
  %v664 = vrcp.pop %v663
  %v665 = vmul.f32 1.0, %v664
  %v666 = vmul.f32 %v665, %v179
  %v667 = vadd.f32 %v666, %v180
  %v668 = vmul.f32 %v667, %v577
  %670 = vrot.lane.b32.xlu0 %v667, 64
  %v671 = vpop.permute.xlu0 %670
  %v673 = vmul.f32 %v667, %v671
  %675 = vrot.lane.b32.xlu0 %v673, 32
  %v676 = vpop.permute.xlu0 %675
  %v678 = vadd.f32 %v668, %v676
  %v679 = vtanh.pop %v678
  %681 = vrot.lane.b32.xlu0 %v679, 64
  %v682 = vpop.permute.xlu0 %681
  %v684 = vmul.f32 %v667, %v682
  %686 = vrot.lane.b32.xlu0 %v684, 32
  %v687 = vpop.permute.xlu0 %686
  %v688 = vsel %vm181, %v687, 0
  %690 = vmatprep.subr.mxu0 0.0
  %691 = vmatpush1.msra.mxu0 %v170
  %692 = vmatprep.subr.mxu0 0.0
  %693 = vmatpush1.msra.mxu0 %v171
  %694 = vmatprep.subr.mxu0 0.0
  %695 = vmatpush1.msra.mxu0 %v172
  %696 = vmatprep.subr.mxu0 0.0
  %697 = vmatpush1.msra.mxu0 %v173
  %698 = vmatprep.subr.mxu0 0.0
  %699 = vmatpush1.msra.mxu0 0.0
  %700 = vmatprep.subr.mxu0 0.0
  %701 = vmatpush1.msra.mxu0 0.0
  %702 = vmatprep.subr.mxu0 0.0
  %703 = vmatpush1.msra.mxu0 0.0
  %704 = vmatprep.subr.mxu0 0.0
  %705 = vmatpush1.msra.mxu0 0.0
  %706 = vmatprep.subr.mxu0 0.0
  %707 = vmatpush1.msra.mxu0 0.0
  %708 = vmatprep.subr.mxu0 0.0
  %709 = vmatpush1.msra.mxu0 0.0
  %710 = vmatprep.subr.mxu0 0.0
  %711 = vmatpush1.msra.mxu0 0.0
  %712 = vmatprep.subr.mxu0 0.0
  %713 = vmatpush1.msra.mxu0 0.0
  %714 = vmatprep.subr.mxu0 0.0
  %715 = vmatpush1.msra.mxu0 0.0
  %716 = vmatprep.subr.mxu0 0.0
  %717 = vmatpush1.msra.mxu0 0.0
  %718 = vmatprep.subr.mxu0 0.0
  %719 = vmatpush1.msra.mxu0 0.0
  %720 = vmatprep.subr.mxu0 0.0
  %721 = vmatpush1.msra.mxu0 0.0
  %722 = vmatprep.subr.mxu0 0.0
  %723 = vmatpush1.msra.mxu0 0.0
  %724 = vmatprep.subr.mxu0 0.0
  %725 = vmatpush1.msra.mxu0 0.0
  %726 = vmatprep.subr.mxu0 0.0
  %727 = vmatpush1.msra.mxu0 0.0
  %728 = vmatprep.subr.mxu0 0.0
  %729 = vmatpush1.msra.mxu0 0.0
  %730 = vmatprep.subr.mxu0 0.0
  %731 = vmatpush1.msra.mxu0 0.0
  %732 = vmatprep.subr.mxu0 0.0
  %733 = vmatpush1.msra.mxu0 0.0
  %734 = vmatprep.subr.mxu0 0.0
  %735 = vmatpush1.msra.mxu0 0.0
  %736 = vmatprep.subr.mxu0 0.0
  %737 = vmatpush1.msra.mxu0 0.0
  %738 = vmatprep.subr.mxu0 0.0
  %739 = vmatpush1.msra.mxu0 0.0
  %740 = vmatprep.subr.mxu0 0.0
  %741 = vmatpush1.msra.mxu0 0.0
  %742 = vmatprep.subr.mxu0 0.0
  %743 = vmatpush1.msra.mxu0 0.0
  %744 = vmatprep.subr.mxu0 0.0
  %745 = vmatpush1.msra.mxu0 0.0
  %746 = vmatprep.subr.mxu0 0.0
  %747 = vmatpush1.msra.mxu0 0.0
  %748 = vmatprep.subr.mxu0 0.0
  %749 = vmatpush1.msra.mxu0 0.0
  %750 = vmatprep.subr.mxu0 0.0
  %751 = vmatpush1.msra.mxu0 0.0
  %752 = vmatprep.subr.mxu0 0.0
  %753 = vmatpush1.msra.mxu0 0.0
  %754 = vmatprep.mubr.f32.mxu0 0.0
  %755 = vmatmul.mubr.f32.gmra.mrb[0].mxu0 %v688
  %v756 = vpop.f32.mrb[0].mxu0
  %v757 = vadd.f32 0.0, %v756
  %v758 = vpop.f32.mrb[0].mxu0
  %759 = vdwg.mxu0
  %v760 = vadd.f32 %v157, %v757
  %v761 = vsub.f32 0.0, %v760
  %v762 = vmul.f32 %v761, 1.442695
  %v763 = vpow.pop %v762
  %v764 = vadd.f32 %v763, 1.0
  %v765 = vrcp.pop %v764
  %v766 = vmul.f32 1.0, %v765
  %v767 = vmul.f32 %v766, %v179
  %v768 = vadd.f32 %v767, %v180
  %v769 = vmul.f32 %v768, %v678
  %771 = vrot.lane.b32.xlu0 %v768, 64
  %v772 = vpop.permute.xlu0 %771
  %v774 = vmul.f32 %v768, %v772
  %776 = vrot.lane.b32.xlu0 %v774, 32
  %v777 = vpop.permute.xlu0 %776
  %v779 = vadd.f32 %v769, %v777
  %v780 = vtanh.pop %v779
  %782 = vrot.lane.b32.xlu0 %v780, 64
  %v783 = vpop.permute.xlu0 %782
  %v785 = vmul.f32 %v768, %v783
  %787 = vrot.lane.b32.xlu0 %v785, 32
  %v788 = vpop.permute.xlu0 %787
  %v789 = vsel %vm181, %v788, 0
  %791 = vmatprep.subr.mxu0 0.0
  %792 = vmatpush1.msra.mxu0 %v170
  %793 = vmatprep.subr.mxu0 0.0
  %794 = vmatpush1.msra.mxu0 %v171
  %795 = vmatprep.subr.mxu0 0.0
  %796 = vmatpush1.msra.mxu0 %v172
  %797 = vmatprep.subr.mxu0 0.0
  %798 = vmatpush1.msra.mxu0 %v173
  %799 = vmatprep.subr.mxu0 0.0
  %800 = vmatpush1.msra.mxu0 0.0
  %801 = vmatprep.subr.mxu0 0.0
  %802 = vmatpush1.msra.mxu0 0.0
  %803 = vmatprep.subr.mxu0 0.0
  %804 = vmatpush1.msra.mxu0 0.0
  %805 = vmatprep.subr.mxu0 0.0
  %806 = vmatpush1.msra.mxu0 0.0
  %807 = vmatprep.subr.mxu0 0.0
  %808 = vmatpush1.msra.mxu0 0.0
  %809 = vmatprep.subr.mxu0 0.0
  %810 = vmatpush1.msra.mxu0 0.0
  %811 = vmatprep.subr.mxu0 0.0
  %812 = vmatpush1.msra.mxu0 0.0
  %813 = vmatprep.subr.mxu0 0.0
  %814 = vmatpush1.msra.mxu0 0.0
  %815 = vmatprep.subr.mxu0 0.0
  %816 = vmatpush1.msra.mxu0 0.0
  %817 = vmatprep.subr.mxu0 0.0
  %818 = vmatpush1.msra.mxu0 0.0
  %819 = vmatprep.subr.mxu0 0.0
  %820 = vmatpush1.msra.mxu0 0.0
  %821 = vmatprep.subr.mxu0 0.0
  %822 = vmatpush1.msra.mxu0 0.0
  %823 = vmatprep.subr.mxu0 0.0
  %824 = vmatpush1.msra.mxu0 0.0
  %825 = vmatprep.subr.mxu0 0.0
  %826 = vmatpush1.msra.mxu0 0.0
  %827 = vmatprep.subr.mxu0 0.0
  %828 = vmatpush1.msra.mxu0 0.0
  %829 = vmatprep.subr.mxu0 0.0
  %830 = vmatpush1.msra.mxu0 0.0
  %831 = vmatprep.subr.mxu0 0.0
  %832 = vmatpush1.msra.mxu0 0.0
  %833 = vmatprep.subr.mxu0 0.0
  %834 = vmatpush1.msra.mxu0 0.0
  %835 = vmatprep.subr.mxu0 0.0
  %836 = vmatpush1.msra.mxu0 0.0
  %837 = vmatprep.subr.mxu0 0.0
  %838 = vmatpush1.msra.mxu0 0.0
  %839 = vmatprep.subr.mxu0 0.0
  %840 = vmatpush1.msra.mxu0 0.0
  %841 = vmatprep.subr.mxu0 0.0
  %842 = vmatpush1.msra.mxu0 0.0
  %843 = vmatprep.subr.mxu0 0.0
  %844 = vmatpush1.msra.mxu0 0.0
  %845 = vmatprep.subr.mxu0 0.0
  %846 = vmatpush1.msra.mxu0 0.0
  %847 = vmatprep.subr.mxu0 0.0
  %848 = vmatpush1.msra.mxu0 0.0
  %849 = vmatprep.subr.mxu0 0.0
  %850 = vmatpush1.msra.mxu0 0.0
  %851 = vmatprep.subr.mxu0 0.0
  %852 = vmatpush1.msra.mxu0 0.0
  %853 = vmatprep.subr.mxu0 0.0
  %854 = vmatpush1.msra.mxu0 0.0
  %855 = vmatprep.mubr.f32.mxu0 0.0
  %856 = vmatmul.mubr.f32.gmra.mrb[0].mxu0 %v789
  %v857 = vpop.f32.mrb[0].mxu0
  %v858 = vadd.f32 0.0, %v857
  %v859 = vpop.f32.mrb[0].mxu0
  %860 = vdwg.mxu0
  %v861 = vadd.f32 %v162, %v858
  %v862 = vsub.f32 0.0, %v861
  %v863 = vmul.f32 %v862, 1.442695
  %v864 = vpow.pop %v863
  %v865 = vadd.f32 %v864, 1.0
  %v866 = vrcp.pop %v865
  %v867 = vmul.f32 1.0, %v866
  %v868 = vmul.f32 %v867, %v179
  %v869 = vadd.f32 %v868, %v180
  %v870 = vmul.f32 %v869, %v779
  %872 = vrot.lane.b32.xlu0 %v869, 64
  %v873 = vpop.permute.xlu0 %872
  %v875 = vmul.f32 %v869, %v873
  %877 = vrot.lane.b32.xlu0 %v875, 32
  %v878 = vpop.permute.xlu0 %877
  %v880 = vadd.f32 %v870, %v878
  %v881 = vtanh.pop %v880
  %883 = vrot.lane.b32.xlu0 %v881, 64
  %v884 = vpop.permute.xlu0 %883
  %v886 = vmul.f32 %v869, %v884
  %888 = vrot.lane.b32.xlu0 %v886, 32
  %v889 = vpop.permute.xlu0 %888
  %v890 = vsel %vm181, %v889, 0
  %892 = vmatprep.subr.mxu0 0.0
  %893 = vmatpush1.msra.mxu0 %v170
  %894 = vmatprep.subr.mxu0 0.0
  %895 = vmatpush1.msra.mxu0 %v171
  %896 = vmatprep.subr.mxu0 0.0
  %897 = vmatpush1.msra.mxu0 %v172
  %898 = vmatprep.subr.mxu0 0.0
  %899 = vmatpush1.msra.mxu0 %v173
  %900 = vmatprep.subr.mxu0 0.0
  %901 = vmatpush1.msra.mxu0 0.0
  %902 = vmatprep.subr.mxu0 0.0
  %903 = vmatpush1.msra.mxu0 0.0
  %904 = vmatprep.subr.mxu0 0.0
  %905 = vmatpush1.msra.mxu0 0.0
  %906 = vmatprep.subr.mxu0 0.0
  %907 = vmatpush1.msra.mxu0 0.0
  %908 = vmatprep.subr.mxu0 0.0
  %909 = vmatpush1.msra.mxu0 0.0
  %910 = vmatprep.subr.mxu0 0.0
  %911 = vmatpush1.msra.mxu0 0.0
  %912 = vmatprep.subr.mxu0 0.0
  %913 = vmatpush1.msra.mxu0 0.0
  %914 = vmatprep.subr.mxu0 0.0
  %915 = vmatpush1.msra.mxu0 0.0
  %916 = vmatprep.subr.mxu0 0.0
  %917 = vmatpush1.msra.mxu0 0.0
  %918 = vmatprep.subr.mxu0 0.0
  %919 = vmatpush1.msra.mxu0 0.0
  %920 = vmatprep.subr.mxu0 0.0
  %921 = vmatpush1.msra.mxu0 0.0
  %922 = vmatprep.subr.mxu0 0.0
  %923 = vmatpush1.msra.mxu0 0.0
  %924 = vmatprep.subr.mxu0 0.0
  %925 = vmatpush1.msra.mxu0 0.0
  %926 = vmatprep.subr.mxu0 0.0
  %927 = vmatpush1.msra.mxu0 0.0
  %928 = vmatprep.subr.mxu0 0.0
  %929 = vmatpush1.msra.mxu0 0.0
  %930 = vmatprep.subr.mxu0 0.0
  %931 = vmatpush1.msra.mxu0 0.0
  %932 = vmatprep.subr.mxu0 0.0
  %933 = vmatpush1.msra.mxu0 0.0
  %934 = vmatprep.subr.mxu0 0.0
  %935 = vmatpush1.msra.mxu0 0.0
  %936 = vmatprep.subr.mxu0 0.0
  %937 = vmatpush1.msra.mxu0 0.0
  %938 = vmatprep.subr.mxu0 0.0
  %939 = vmatpush1.msra.mxu0 0.0
  %940 = vmatprep.subr.mxu0 0.0
  %941 = vmatpush1.msra.mxu0 0.0
  %942 = vmatprep.subr.mxu0 0.0
  %943 = vmatpush1.msra.mxu0 0.0
  %944 = vmatprep.subr.mxu0 0.0
  %945 = vmatpush1.msra.mxu0 0.0
  %946 = vmatprep.subr.mxu0 0.0
  %947 = vmatpush1.msra.mxu0 0.0
  %948 = vmatprep.subr.mxu0 0.0
  %949 = vmatpush1.msra.mxu0 0.0
  %950 = vmatprep.subr.mxu0 0.0
  %951 = vmatpush1.msra.mxu0 0.0
  %952 = vmatprep.subr.mxu0 0.0
  %953 = vmatpush1.msra.mxu0 0.0
  %954 = vmatprep.subr.mxu0 0.0
  %955 = vmatpush1.msra.mxu0 0.0
  %956 = vmatprep.mubr.f32.mxu0 0.0
  %957 = vmatmul.mubr.f32.gmra.mrb[0].mxu0 %v890
  %v958 = vpop.f32.mrb[0].mxu0
  %v959 = vadd.f32 0.0, %v958
  %v960 = vpop.f32.mrb[0].mxu0
  %961 = vdwg.mxu0
  %v962 = vadd.f32 %v167, %v959
  %v963 = vsub.f32 0.0, %v962
  %v964 = vmul.f32 %v963, 1.442695
  %v965 = vpow.pop %v964
  %v966 = vadd.f32 %v965, 1.0
  %v967 = vrcp.pop %v966
  %v968 = vmul.f32 1.0, %v967
  %v969 = vmul.f32 %v968, %v179
  %v970 = vadd.f32 %v969, %v180
  %v971 = vmul.f32 %v970, %v880
  %973 = vrot.lane.b32.xlu0 %v970, 64
  %v974 = vpop.permute.xlu0 %973
  %v976 = vmul.f32 %v970, %v974
  %978 = vrot.lane.b32.xlu0 %v976, 32
  %v979 = vpop.permute.xlu0 %978
  %v981 = vadd.f32 %v971, %v979
  %v982 = vtanh.pop %v981
  %984 = vrot.lane.b32.xlu0 %v982, 64
  %v985 = vpop.permute.xlu0 %984
  %v987 = vmul.f32 %v970, %v985
  %v988 = vlaneseq
  %v989 = vshrl.u32 %v988, 7
  %vm990 = vcmp.lt.s32.totalorder %v989, 4
  %v991 = vsel %vm990, %v987, -inf
  %vm992 = vcmask 1048320
  %v993 = vsel %vm992, %v991, -inf
  %v994 = vrot.slane %v993, 4
  %v995 = vmax.f32 %v993, %v994
  %v996 = vrot.slane %v995, 2
  %v997 = vmax.f32 %v995, %v996
  %v998 = vrot.slane %v997, 1
  %v999 = vmax.f32 %v997, %v998
  %v1000 = vld [vmem:[%s4] sm:$0xff]
  %v1001 = vld [vmem:[%s4 + $0x8] sm:$0xff]
  %v1002 = vld [vmem:[%s4 + $0x10] sm:$0xff]
  %v1003 = vld [vmem:[%s4 + $0x18] sm:$0xff]
  %v1004 = vld [vmem:[%s5] sm:$0x1]
  %1006 = vrot.lane.b32.xlu0 %v999, 32
  %v1007 = vpop.permute.xlu0 %1006
  %v1008 = vsel %vm181, %v1007, 0
  %1010 = vmatprep.subr.mxu0 0.0
  %1011 = vmatpush1.msra.mxu0 %v1000
  %1012 = vmatprep.subr.mxu0 0.0
  %1013 = vmatpush1.msra.mxu0 %v1001
  %1014 = vmatprep.subr.mxu0 0.0
  %1015 = vmatpush1.msra.mxu0 %v1002
  %1016 = vmatprep.subr.mxu0 0.0
  %1017 = vmatpush1.msra.mxu0 %v1003
  %1018 = vmatprep.subr.mxu0 0.0
  %1019 = vmatpush1.msra.mxu0 0.0
  %1020 = vmatprep.subr.mxu0 0.0
  %1021 = vmatpush1.msra.mxu0 0.0
  %1022 = vmatprep.subr.mxu0 0.0
  %1023 = vmatpush1.msra.mxu0 0.0
  %1024 = vmatprep.subr.mxu0 0.0
  %1025 = vmatpush1.msra.mxu0 0.0
  %1026 = vmatprep.subr.mxu0 0.0
  %1027 = vmatpush1.msra.mxu0 0.0
  %1028 = vmatprep.subr.mxu0 0.0
  %1029 = vmatpush1.msra.mxu0 0.0
  %1030 = vmatprep.subr.mxu0 0.0
  %1031 = vmatpush1.msra.mxu0 0.0
  %1032 = vmatprep.subr.mxu0 0.0
  %1033 = vmatpush1.msra.mxu0 0.0
  %1034 = vmatprep.subr.mxu0 0.0
  %1035 = vmatpush1.msra.mxu0 0.0
  %1036 = vmatprep.subr.mxu0 0.0
  %1037 = vmatpush1.msra.mxu0 0.0
  %1038 = vmatprep.subr.mxu0 0.0
  %1039 = vmatpush1.msra.mxu0 0.0
  %1040 = vmatprep.subr.mxu0 0.0
  %1041 = vmatpush1.msra.mxu0 0.0
  %1042 = vmatprep.subr.mxu0 0.0
  %1043 = vmatpush1.msra.mxu0 0.0
  %1044 = vmatprep.subr.mxu0 0.0
  %1045 = vmatpush1.msra.mxu0 0.0
  %1046 = vmatprep.subr.mxu0 0.0
  %1047 = vmatpush1.msra.mxu0 0.0
  %1048 = vmatprep.subr.mxu0 0.0
  %1049 = vmatpush1.msra.mxu0 0.0
  %1050 = vmatprep.subr.mxu0 0.0
  %1051 = vmatpush1.msra.mxu0 0.0
  %1052 = vmatprep.subr.mxu0 0.0
  %1053 = vmatpush1.msra.mxu0 0.0
  %1054 = vmatprep.subr.mxu0 0.0
  %1055 = vmatpush1.msra.mxu0 0.0
  %1056 = vmatprep.subr.mxu0 0.0
  %1057 = vmatpush1.msra.mxu0 0.0
  %1058 = vmatprep.subr.mxu0 0.0
  %1059 = vmatpush1.msra.mxu0 0.0
  %1060 = vmatprep.subr.mxu0 0.0
  %1061 = vmatpush1.msra.mxu0 0.0
  %1062 = vmatprep.subr.mxu0 0.0
  %1063 = vmatpush1.msra.mxu0 0.0
  %1064 = vmatprep.subr.mxu0 0.0
  %1065 = vmatpush1.msra.mxu0 0.0
  %1066 = vmatprep.subr.mxu0 0.0
  %1067 = vmatpush1.msra.mxu0 0.0
  %1068 = vmatprep.subr.mxu0 0.0
  %1069 = vmatpush1.msra.mxu0 0.0
  %1070 = vmatprep.subr.mxu0 0.0
  %1071 = vmatpush1.msra.mxu0 0.0
  %1072 = vmatprep.subr.mxu0 0.0
  %1073 = vmatpush1.msra.mxu0 0.0
  %1074 = vmatprep.mubr.f32.mxu0 0.0
  %1075 = vmatmul.mubr.f32.gmra.mrb[0].mxu0 %v1008
  %v1076 = vpop.f32.mrb[0].mxu0
  %v1077 = vadd.f32 %v1004, %v1076
  %v1078 = vpop.f32.mrb[0].mxu0
  %1079 = vdwg.mxu0
  %v1080 = vsub.f32 0.0, %v1077
  %v1081 = vmul.f32 %v1080, 1.442695
  %v1082 = vpow.pop %v1081
  %v1083 = vadd.f32 %v1082, 1.0
  %v1084 = vrcp.pop %v1083
  %1085 = vst [vmem:[%s6] sm:$0x1] %v1084
  // Predicated region
  $region26: #{lstm_tagger_forward.1} parent=0 // pred_check
    _
  $region27: #{lstm_tagger_forward.1} parent=0 // pred_check_branch
    %1087 = sbr.rel (0) target = $region29
  $region28: #{lstm_tagger_forward.1} parent=0 // pred_region
    _
  $region29: #{lstm_tagger_forward.1} parent=0 // pred_fallthru
    _
  // Predicated region
  $region30: #{lstm_tagger_forward.1} parent=0 // pred_check
    _
  $region31: #{lstm_tagger_forward.1} parent=0 // pred_check_branch
    %1089 = sbr.rel (0) target = $region33
  $region32: #{lstm_tagger_forward.1} parent=0 // pred_region
    _
  $region33: #{lstm_tagger_forward.1} parent=0 // pred_fallthru
    _

</llo_original>
